<compile_context>
chip_gen: v7x
topology: tpu7x:2x2x1
jax: 0.10.0
libtpu: 0.0.40
codegen_flags: <defaults>
</compile_context>

<pallas_src>
import functools

import jax
import jax.numpy as jnp
from jax import lax
from jax.experimental import pallas as pl
from jax.experimental.pallas import tpu as pltpu

_LANE = 128
_MIB = 1024 * 1024


def _round_up(x, m):
    return ((x + m - 1) // m) * m


def _pad2d(a, rows, cols):
    return jnp.pad(a, ((0, rows - a.shape[0]), (0, cols - a.shape[1])))


def _vmem_capacity_bytes():
    try:
        return int(pltpu.get_tpu_info().vmem_capacity_bytes)
    except Exception:
        return 64 * _MIB  # conservative (v7x) fallback


def _vmem_budget():
    """Scoped-VMEM budget used both as vmem_limit_bytes and sizing threshold."""
    cap = _vmem_capacity_bytes()
    if cap >= 100 * _MIB:        # v5e / v6e: 128 MiB physical VMEM
        return 96 * _MIB
    return 40 * _MIB             # v7x: 64 MiB physical per TensorCore


# ----------------------------------------------------------------------------
# Plain-JAX glue: dense symmetric-normalized adjacency, built directly at the
# padded shape (padding rows/cols stay exactly zero -> results are exact).
# Mirrors PyG gcn_norm: add_remaining_self_loops (keep existing self-loop
# weights, add weight-1 loops where missing), then D^{-1/2}(A+I)D^{-1/2}.
# ----------------------------------------------------------------------------
def normalized_adjacency_padded(edge_index, num_nodes, n_pad,
                                out_dtype=jnp.bfloat16):
    src, dst = edge_index[0], edge_index[1]
    a = jnp.zeros((n_pad, n_pad), dtype=jnp.float32)
    a = a.at[dst, src].add(1.0)           # message flows src -> dst (row = target)
    idx = jnp.arange(n_pad)
    diag = a[idx, idx]
    add_loop = jnp.where((idx < num_nodes) & (diag == 0.0), 1.0, 0.0)
    a = a.at[idx, idx].add(add_loop)      # add only the *missing* self loops
    deg = a.sum(axis=1)
    dinv = jnp.where(deg > 0.0, lax.rsqrt(deg), 0.0)
    return (dinv[:, None] * a * dinv[None, :]).astype(out_dtype)


# ----------------------------------------------------------------------------
# Fused small-N kernel: Z = A @ bf16(X @ W1) + b1 -> relu -> A @ bf16(H @ W2) + b2
# Everything resident in VMEM; H kept in a bf16 VMEM scratch; A DMA'd once.
# ----------------------------------------------------------------------------
def _fused_encoder_kernel(a_ref, x_ref, w1_ref, b1_ref, w2_ref, b2_ref,
                          z_ref, h_ref):
    a = a_ref[...]                                                  # bf16
    xw1 = jnp.dot(x_ref[...], w1_ref[...], preferred_element_type=jnp.float32)
    h = jnp.dot(a, xw1.astype(jnp.bfloat16),
                preferred_element_type=jnp.float32) + b1_ref[...]
    h_ref[...] = jnp.maximum(h, 0.0).astype(h_ref.dtype)            # bf16 scratch
    hw2 = jnp.dot(h_ref[...], w2_ref[...], preferred_element_type=jnp.float32)
    z = jnp.dot(a, hw2.astype(jnp.bfloat16),
                preferred_element_type=jnp.float32) + b2_ref[...]
    z_ref[...] = z.astype(z_ref.dtype)


def _encoder_fused(a_pad, x_pad, w1, b1, w2, b2, vmem_limit):
    n_pad = a_pad.shape[0]
    f_in = x_pad.shape[1]
    f_hid = w1.shape[1]
    f_out = w2.shape[1]
    flops = 2 * n_pad * (f_in * f_hid + n_pad * f_hid
                         + f_hid * f_out + n_pad * f_out)
    bytes_accessed = (n_pad * n_pad * 2 + n_pad * f_in * 2
                      + f_in * f_hid * 2 + f_hid * f_out * 2
                      + (f_hid + f_out) * 4 + n_pad * f_out * 4)
    return pl.pallas_call(
        _fused_encoder_kernel,
        out_shape=jax.ShapeDtypeStruct((n_pad, f_out), jnp.float32),
        scratch_shapes=[pltpu.VMEM((n_pad, f_hid), jnp.bfloat16)],
        compiler_params=pltpu.CompilerParams(vmem_limit_bytes=vmem_limit),
        cost_estimate=pl.CostEstimate(
            flops=int(flops), transcendentals=0,
            bytes_accessed=int(bytes_accessed)),
    )(a_pad, x_pad, w1, b1, w2, b2)


def _fused_fits(n_pad, f_in_p, f_hid_p, f_out_p, budget):
    need = (
        n_pad * n_pad * 2                       # A_hat (bf16)
        + n_pad * f_in_p * 2                    # X (bf16)
        + n_pad * f_hid_p * 2                   # H scratch (bf16)
        + n_pad * (f_hid_p + f_out_p) * 4       # xw1 / hw2 f32 temporaries
        + n_pad * f_out_p * 4                   # output (f32)
        + (f_in_p * f_hid_p + f_hid_p * f_out_p) * 2
        + (f_hid_p + f_out_p) * 4
    )
    return need + 4 * _MIB <= budget


# ----------------------------------------------------------------------------
# Tiled path: one fused GCN-layer kernel per layer.
#   out = A_hat @ (X @ W) + b (+ optional ReLU)
# A_hat streamed as (TM, TK) bf16 tiles over a K-reduction axis; X streamed as
# (TK, F_in) bf16 blocks; W resident; f32 VMEM accumulator with pl.when
# init/finalize.  The per-step X_k @ W recompute hides under the A_hat DMA.
# ----------------------------------------------------------------------------
def _gcn_layer_kernel(a_ref, x_ref, w_ref, b_ref, o_ref, acc_ref, *,
                      apply_relu: bool):
    k = pl.program_id(1)

    @pl.when(k == 0)
    def _():
        acc_ref[...] = jnp.zeros_like(acc_ref)

    xw = jnp.dot(x_ref[...], w_ref[...], preferred_element_type=jnp.float32)
    acc_ref[...] += jnp.dot(
        a_ref[...], xw.astype(jnp.bfloat16), preferred_element_type=jnp.float32
    )

    @pl.when(k == pl.num_programs(1) - 1)
    def _():
        out = acc_ref[...] + b_ref[...]
        if apply_relu:
            out = jnp.maximum(out, 0.0)
        o_ref[...] = out.astype(o_ref.dtype)


def _gcn_layer(a_pad, x_pad, w, b_row, *, apply_relu, out_dtype, tm, tk,
               vmem_limit):
    n_pad = a_pad.shape[0]
    f_in = x_pad.shape[1]
    f_out = w.shape[1]
    grid_m, grid_k = n_pad // tm, n_pad // tk
    kernel = functools.partial(_gcn_layer_kernel, apply_relu=apply_relu)
    flops = 2 * n_pad * n_pad * f_out + 2 * grid_m * n_pad * f_in * f_out
    bytes_accessed = (n_pad * n_pad * 2                   # A_hat (bf16)
                      + grid_m * n_pad * f_in * 2         # X re-read per row tile
                      + f_in * f_out * 2 + f_out * 4
                      + n_pad * f_out * jnp.dtype(out_dtype).itemsize)
    return pl.pallas_call(
        kernel,
        out_shape=jax.ShapeDtypeStruct((n_pad, f_out), out_dtype),
        grid=(grid_m, grid_k),
        in_specs=[
            pl.BlockSpec((tm, tk), lambda i, k: (i, k)),        # A_hat tile (bf16)
            pl.BlockSpec((tk, f_in), lambda i, k: (k, 0)),      # X row block (bf16)
            pl.BlockSpec((f_in, f_out), lambda i, k: (0, 0)),   # W (resident, bf16)
            pl.BlockSpec((1, f_out), lambda i, k: (0, 0)),      # bias (f32)
        ],
        out_specs=pl.BlockSpec((tm, f_out), lambda i, k: (i, 0)),
        scratch_shapes=[pltpu.VMEM((tm, f_out), jnp.float32)],
        compiler_params=pltpu.CompilerParams(
            dimension_semantics=("parallel", "arbitrary"),
            vmem_limit_bytes=vmem_limit,
        ),
        cost_estimate=pl.CostEstimate(
            flops=int(flops), transcendentals=0,
            bytes_accessed=int(bytes_accessed)),
    )(a_pad, x_pad, w, b_row)


def _choose_tiles(n, f_x_p, f_o_p, budget):
    """Pick (tm, tk, n_pad).  Largest A tiles first; n_pad is a multiple of
    both tm and tk with n_pad // tm even (v7x megacore split), padding waste
    bounded at ~12.5% of rows, and the double-buffered working set within the
    VMEM budget (derived from the actual padded feature widths)."""
    candidates = ((1024, 2048), (512, 1024), (256, 512), (128, 256))
    for idx, (tm, tk) in enumerate(candidates):
        last = idx == len(candidates) - 1
        granule = max(tk, 2 * tm)
        n_pad = _round_up(max(n, 1), granule)
        waste_ok = (n_pad - n) * 8 <= n
        need = (2 * (tm * tk * 2 + tk * f_x_p * 2 + tm * f_o_p * 4)  # A, X, out
                + tm * f_o_p * 4                                     # f32 accumulator
                + 2 * (f_x_p * f_o_p * 2 + f_o_p * 4))               # W, bias
        fits = need + 2 * _MIB <= budget
        if last or (waste_ok and fits):
            return tm, tk, n_pad
    raise AssertionError("unreachable")


# ----------------------------------------------------------------------------
# Encoder: x = relu(GCNConv(x)); return GCNConv(x)
# ----------------------------------------------------------------------------
def encoder_forward(x, edge_index, params, *, force_tiled: bool = False):
    n, f_in = x.shape
    f_hid = params["w1"].shape[1]
    f_out = params["w2"].shape[1]

    f_in_p = _round_up(f_in, _LANE)
    f_hid_p = _round_up(f_hid, _LANE)
    f_out_p = _round_up(f_out, _LANE)
    budget = _vmem_budget()

    n_pad_fused = _round_up(n, _LANE)
    use_fused = (not force_tiled) and _fused_fits(
        n_pad_fused, f_in_p, f_hid_p, f_out_p, budget)

    if use_fused:
        n_pad = n_pad_fused
        tm = tk = None
    else:
        tm, tk, n_pad = _choose_tiles(
            n, max(f_in_p, f_hid_p), max(f_hid_p, f_out_p), budget)

    # A_hat built directly at padded shape in bf16 (no extra O(N^2) pad copy).
    a_pad = normalized_adjacency_padded(edge_index, n, n_pad, jnp.bfloat16)
    x_pad = _pad2d(x, n_pad, f_in_p).astype(jnp.bfloat16)
    w1 = _pad2d(params["w1"], f_in_p, f_hid_p).astype(jnp.bfloat16)
    w2 = _pad2d(params["w2"], f_hid_p, f_out_p).astype(jnp.bfloat16)
    b1 = _pad2d(params["b1"].reshape(1, -1).astype(jnp.float32), 1, f_hid_p)
    b2 = _pad2d(params["b2"].reshape(1, -1).astype(jnp.float32), 1, f_out_p)

    if use_fused:
        z_pad = _encoder_fused(a_pad, x_pad, w1, b1, w2, b2, budget)
    else:
        h = _gcn_layer(a_pad, x_pad, w1, b1, apply_relu=True,
                       out_dtype=jnp.bfloat16, tm=tm, tk=tk, vmem_limit=budget)
        z_pad = _gcn_layer(a_pad, h, w2, b2, apply_relu=False,
                           out_dtype=jnp.float32, tm=tm, tk=tk,
                           vmem_limit=budget)

    return z_pad[:n, :f_out]


def encoder_reference(x, edge_index, params):
    a = normalized_adjacency_padded(edge_index, x.shape[0], x.shape[0],
                                    jnp.float32)
    h = jnp.maximum(a @ (x @ params["w1"]) + params["b1"], 0.0)
    return a @ (h @ params["w2"]) + params["b2"]


def init_encoder_params(key, in_channels, out_channels):
    hidden = 2 * out_channels
    k1, k2 = jax.random.split(key)

    def glorot(k, fan_in, fan_out):
        lim = jnp.sqrt(6.0 / (fan_in + fan_out))
        return jax.random.uniform(
            k, (fan_in, fan_out), dtype=jnp.float32, minval=-lim, maxval=lim
        )

    return {
        "w1": glorot(k1, in_channels, hidden),
        "b1": jnp.zeros((hidden,), dtype=jnp.float32),
        "w2": glorot(k2, hidden, out_channels),
        "b2": jnp.zeros((out_channels,), dtype=jnp.float32),
    }


if __name__ == "__main__":
    key = jax.random.PRNGKey(0)
    k_x, k_e, k_p = jax.random.split(key, 3)

    num_nodes = 16
    in_channels = 8
    out_channels = 4
    num_edges = 24

    x = jax.random.normal(k_x, (num_nodes, in_channels), dtype=jnp.float32)

    # deterministic random directed edges, symmetrized (undirected graph)
    src = jax.random.randint(k_e, (num_edges,), 0, num_nodes)
    dst = jnp.roll(src, 1)
    edge_index = jnp.stack(
        [jnp.concatenate([src, dst]), jnp.concatenate([dst, src])], axis=0
    ).astype(jnp.int32)

    params = init_encoder_params(k_p, in_channels, out_channels)

    # Fused (small-N) path
    z_fused = encoder_forward(x, edge_index, params)
    jax.block_until_ready(z_fused)

    # Tiled (large-N) path, exercised on the same small graph
    z_tiled = encoder_forward(x, edge_index, params, force_tiled=True)
    jax.block_until_ready(z_tiled)

    # Pure-JAX f32 reference
    z_ref = encoder_reference(x, edge_index, params)
    jax.block_until_ready(z_ref)

    assert z_fused.shape == (num_nodes, out_channels)
    assert z_fused.dtype == jnp.float32
    # bf16 MXU inputs (f32 accumulation) -> loosened, scale-aware tolerance.
    tol = 5e-2 * (float(jnp.max(jnp.abs(z_ref))) + 1.0)
    assert float(jnp.max(jnp.abs(z_fused - z_ref))) <= tol
    assert float(jnp.max(jnp.abs(z_tiled - z_ref))) <= tol
    print("KERNEL_OK")
</pallas_src>

<mosaic_0001>
module attributes {stable_mosaic.version = 11 : i64} {
  func.func @_fused_encoder_kernel(%arg0: memref<128x128xbf16, #tpu.memory_space<vmem>>, %arg1: memref<128x128xbf16, #tpu.memory_space<vmem>>, %arg2: memref<128x128xbf16, #tpu.memory_space<vmem>>, %arg3: memref<1x128xf32, #tpu.memory_space<vmem>>, %arg4: memref<128x128xbf16, #tpu.memory_space<vmem>>, %arg5: memref<1x128xf32, #tpu.memory_space<vmem>>, %arg6: memref<128x128xf32, #tpu.memory_space<vmem>>, %arg7: memref<128x128xbf16, #tpu.memory_space<vmem>>) attributes {dimension_semantics = [], scalar_prefetch = 0 : i64, scratch_operands = 1 : i64, tpu.core_type = #tpu.core_type<tc>} {
    %c0 = arith.constant 0 : index
    %c0_0 = arith.constant 0 : index
    %0 = vector.load %arg0[%c0, %c0_0] : memref<128x128xbf16, #tpu.memory_space<vmem>>, vector<128x128xbf16>
    %c0_1 = arith.constant 0 : index
    %c0_2 = arith.constant 0 : index
    %1 = vector.load %arg1[%c0_1, %c0_2] : memref<128x128xbf16, #tpu.memory_space<vmem>>, vector<128x128xbf16>
    %c0_3 = arith.constant 0 : index
    %c0_4 = arith.constant 0 : index
    %2 = vector.load %arg2[%c0_3, %c0_4] : memref<128x128xbf16, #tpu.memory_space<vmem>>, vector<128x128xbf16>
    %cst = arith.constant dense<0.000000e+00> : vector<128x128xf32>
    %3 = tpu.matmul %1, %2, %cst {dimension_numbers = #tpu.dot_dimension_numbers<[1], [0], [0], [1], [0, 0, 1, 1], [], []>} : vector<128x128xbf16>, vector<128x128xbf16>, vector<128x128xf32> -> vector<128x128xf32>
    %4 = arith.truncf %3 : vector<128x128xf32> to vector<128x128xbf16>
    %cst_5 = arith.constant dense<0.000000e+00> : vector<128x128xf32>
    %5 = tpu.matmul %0, %4, %cst_5 {dimension_numbers = #tpu.dot_dimension_numbers<[1], [0], [0], [1], [0, 0, 1, 1], [], []>} : vector<128x128xbf16>, vector<128x128xbf16>, vector<128x128xf32> -> vector<128x128xf32>
    %c0_6 = arith.constant 0 : index
    %c0_7 = arith.constant 0 : index
    %6 = vector.load %arg3[%c0_6, %c0_7] : memref<1x128xf32, #tpu.memory_space<vmem>>, vector<1x128xf32>
    %7 = vector.broadcast %6 : vector<1x128xf32> to vector<128x128xf32>
    %8 = arith.addf %5, %7 : vector<128x128xf32>
    %cst_8 = arith.constant 0.000000e+00 : f32
    %9 = vector.broadcast %cst_8 : f32 to vector<128x128xf32>
    %10 = arith.maximumf %8, %9 : vector<128x128xf32>
    %11 = arith.truncf %10 : vector<128x128xf32> to vector<128x128xbf16>
    %c0_9 = arith.constant 0 : index
    %c0_10 = arith.constant 0 : index
    %12 = vector.load %arg7[%c0_9, %c0_10] : memref<128x128xbf16, #tpu.memory_space<vmem>>, vector<128x128xbf16>
    tpu.vector_store %arg7[%c0_9, %c0_10], %11 {strides = array<i32>} : memref<128x128xbf16, #tpu.memory_space<vmem>>, vector<128x128xbf16>,
    %c0_11 = arith.constant 0 : index
    %c0_12 = arith.constant 0 : index
    %13 = vector.load %arg7[%c0_11, %c0_12] : memref<128x128xbf16, #tpu.memory_space<vmem>>, vector<128x128xbf16>
    %c0_13 = arith.constant 0 : index
    %c0_14 = arith.constant 0 : index
    %14 = vector.load %arg4[%c0_13, %c0_14] : memref<128x128xbf16, #tpu.memory_space<vmem>>, vector<128x128xbf16>
    %cst_15 = arith.constant dense<0.000000e+00> : vector<128x128xf32>
    %15 = tpu.matmul %13, %14, %cst_15 {dimension_numbers = #tpu.dot_dimension_numbers<[1], [0], [0], [1], [0, 0, 1, 1], [], []>} : vector<128x128xbf16>, vector<128x128xbf16>, vector<128x128xf32> -> vector<128x128xf32>
    %16 = arith.truncf %15 : vector<128x128xf32> to vector<128x128xbf16>
    %cst_16 = arith.constant dense<0.000000e+00> : vector<128x128xf32>
    %17 = tpu.matmul %0, %16, %cst_16 {dimension_numbers = #tpu.dot_dimension_numbers<[1], [0], [0], [1], [0, 0, 1, 1], [], []>} : vector<128x128xbf16>, vector<128x128xbf16>, vector<128x128xf32> -> vector<128x128xf32>
    %c0_17 = arith.constant 0 : index
    %c0_18 = arith.constant 0 : index
    %18 = vector.load %arg5[%c0_17, %c0_18] : memref<1x128xf32, #tpu.memory_space<vmem>>, vector<1x128xf32>
    %19 = vector.broadcast %18 : vector<1x128xf32> to vector<128x128xf32>
    %20 = arith.addf %17, %19 : vector<128x128xf32>
    %c0_19 = arith.constant 0 : index
    %c0_20 = arith.constant 0 : index
    %21 = vector.load %arg6[%c0_19, %c0_20] : memref<128x128xf32, #tpu.memory_space<vmem>>, vector<128x128xf32>
    tpu.vector_store %arg6[%c0_19, %c0_20], %20 {strides = array<i32>} : memref<128x128xf32, #tpu.memory_space<vmem>>, vector<128x128xf32>,
    return
  }
}

</mosaic_0001>

<llo_original>
// kernel: tpu_custom_call.1
$region0: #{tpu_custom_call.1}
  #allocation0 [shape = 'u32[]', space=smem, size = 0x4, offset = 0x4, fixed_abs, tag = 'smem constant byte address 0x4 - core index']
  #allocation1 [shape = 'u32[144,128]{1,0:T(1,128)}', space=vmem, size = 0x12000, scoped, tag = 'internal scratch']
  #allocation2 [shape = 'bf16[128,128]{1,0:T(16,128)(2,1)}', space=vmem, size = 0x8000, scoped, tag = 'scratch operand']
  %s0 = inlined_call_operand.hbm [shape: bf16[128,128], index: 0, kind: input, shape index: {}]
  %s1 = inlined_call_operand.hbm [shape: bf16[128,128], index: 1, kind: input, shape index: {}]
  %s2 = inlined_call_operand.hbm [shape: bf16[128,128], index: 2, kind: input, shape index: {}]
  %s3 = inlined_call_operand.vmem [shape: f32[1,128], index: 3, kind: input, shape index: {}]
  %s4 = inlined_call_operand.hbm [shape: bf16[128,128], index: 4, kind: input, shape index: {}]
  %s5 = inlined_call_operand.vmem [shape: f32[1,128], index: 5, kind: input, shape index: {}]
  %s6 = inlined_call_operand.hbm [shape: f32[128,128], index: 6, kind: output, shape index: {}]
  %s7 = sld [smem:[#allocation0]]
  $region50: #{tpu_custom_call.1} parent=0
    _
  %s9 = ssub.s32 1, %s7
  %s10 = scalar_select 0, %s9, %s7
  $region1: #{tpu_custom_call.1} parent=0
    #allocation3 [shape = 'u8[32768]{0}', space=vmem, size = 0x8000, scoped, tag = 'input window, operand 0, single buffered']
    #allocation4 [shape = 's32[1]{0}', space=sflag, size = 0x4, scoped, tag = 'scoped memory for tpu_custom_call.1']
    #allocation5 [shape = 's32[1]{0}', space=sflag, size = 0x4, scoped, tag = 'scoped memory for tpu_custom_call.1']
    #allocation6 [shape = 'u8[32768]{0}', space=vmem, size = 0x8000, scoped, tag = 'input window, operand 1, single buffered']
    #allocation7 [shape = 's32[1]{0}', space=sflag, size = 0x4, scoped, tag = 'scoped memory for tpu_custom_call.1']
    #allocation8 [shape = 'u8[32768]{0}', space=vmem, size = 0x8000, scoped, tag = 'input window, operand 2, single buffered']
    #allocation9 [shape = 'u8[32768]{0}', space=vmem, size = 0x8000, scoped, tag = 'input window, operand 4, single buffered']
    #allocation10 [shape = 's32[1]{0}', space=sflag, size = 0x4, scoped, tag = 'scoped memory for tpu_custom_call.1']
    #allocation11 [shape = 'u8[65536]{0}', space=vmem, size = 0x10000, scoped, tag = 'output window, operand 0, single buffered']
    %11 = vsyncpa [#allocation4], 0
    %12 = vsyncpa [#allocation7], 0
    %13 = vsyncpa [#allocation10], 0
    %14 = vsyncpa [#allocation5], 0
    // Predicated region
    $region2: #{tpu_custom_call.1} parent=1 // pred_check
      _
    $region3: #{tpu_custom_call.1} parent=1 // pred_check_branch
      %16 = sbr.rel (0) target = $region5
    $region4: #{tpu_custom_call.1} parent=1 // pred_region
      %s18 = ssub.s32 1024, 1024
      %19 = vsyncadd [#allocation4], %s18
      %s20 = sshll.u32 [#allocation3], 4
      %s21 = int_to_ptr.vmem [resolvable:$true] %s20
      %26 = dma.hbm_to_vmem [thread:$0]  %s0, 1024, %s21, [#allocation4], 64, 64, 4
    $region5: #{tpu_custom_call.1} parent=1 // pred_fallthru
      _
    // Predicated region
    $region6: #{tpu_custom_call.1} parent=1 // pred_check
      _
    $region7: #{tpu_custom_call.1} parent=1 // pred_check_branch
      %28 = sbr.rel (0) target = $region9
    $region8: #{tpu_custom_call.1} parent=1 // pred_region
      %s30 = ssub.s32 1024, 1024
      %31 = vsyncadd [#allocation7], %s30
      %s32 = sshll.u32 [#allocation6], 4
      %s33 = int_to_ptr.vmem [resolvable:$true] %s32
      %38 = dma.hbm_to_vmem [thread:$0]  %s1, 1024, %s33, [#allocation7], 64, 64, 4
    $region9: #{tpu_custom_call.1} parent=1 // pred_fallthru
      _
    // Predicated region
    $region10: #{tpu_custom_call.1} parent=1 // pred_check
      _
    $region11: #{tpu_custom_call.1} parent=1 // pred_check_branch
      %40 = sbr.rel (0) target = $region13
    $region12: #{tpu_custom_call.1} parent=1 // pred_region
      %s42 = ssub.s32 1024, 1024
      %43 = vsyncadd [#allocation7], %s42
      %s44 = sshll.u32 [#allocation8], 4
      %s45 = int_to_ptr.vmem [resolvable:$true] %s44
      %50 = dma.hbm_to_vmem [thread:$0]  %s2, 1024, %s45, [#allocation7], 64, 64, 4
    $region13: #{tpu_custom_call.1} parent=1 // pred_fallthru
      _
    // Predicated region
    $region14: #{tpu_custom_call.1} parent=1 // pred_check
      _
    $region15: #{tpu_custom_call.1} parent=1 // pred_check_branch
      %52 = sbr.rel (0) target = $region17
    $region16: #{tpu_custom_call.1} parent=1 // pred_region
      _
    $region17: #{tpu_custom_call.1} parent=1 // pred_fallthru
      _
    // Predicated region
    $region18: #{tpu_custom_call.1} parent=1 // pred_check
      _
    $region19: #{tpu_custom_call.1} parent=1 // pred_check_branch
      %54 = sbr.rel (0) target = $region21
    $region20: #{tpu_custom_call.1} parent=1 // pred_region
      %s56 = ssub.s32 1024, 1024
      %57 = vsyncadd [#allocation10], %s56
      %s58 = sshll.u32 [#allocation9], 4
      %s59 = int_to_ptr.vmem [resolvable:$true] %s58
      %64 = dma.hbm_to_vmem [thread:$0]  %s4, 1024, %s59, [#allocation10], 64, 64, 4
    $region21: #{tpu_custom_call.1} parent=1 // pred_fallthru
      _
    // Predicated region
    $region22: #{tpu_custom_call.1} parent=1 // pred_check
      _
    $region23: #{tpu_custom_call.1} parent=1 // pred_check_branch
      %66 = sbr.rel (0) target = $region25
    $region24: #{tpu_custom_call.1} parent=1 // pred_region
      _
    $region25: #{tpu_custom_call.1} parent=1 // pred_fallthru
      _
    // Predicated region
    $region26: #{tpu_custom_call.1} parent=1 // pred_check
      _
    $region27: #{tpu_custom_call.1} parent=1 // pred_check_branch
      %68 = sbr.rel (0) target = $region29
    $region28: #{tpu_custom_call.1} parent=1 // pred_region
      %69 = dma.done [#allocation4], 1024
    $region29: #{tpu_custom_call.1} parent=1 // pred_fallthru
      _
    // Predicated region
    $region30: #{tpu_custom_call.1} parent=1 // pred_check
      _
    $region31: #{tpu_custom_call.1} parent=1 // pred_check_branch
      %71 = sbr.rel (0) target = $region33
    $region32: #{tpu_custom_call.1} parent=1 // pred_region
      %72 = dma.done [#allocation7], 1024
    $region33: #{tpu_custom_call.1} parent=1 // pred_fallthru
      _
    // Predicated region
    $region34: #{tpu_custom_call.1} parent=1 // pred_check
      _
    $region35: #{tpu_custom_call.1} parent=1 // pred_check_branch
      %74 = sbr.rel (0) target = $region37
    $region36: #{tpu_custom_call.1} parent=1 // pred_region
      %75 = dma.done [#allocation7], 1024
    $region37: #{tpu_custom_call.1} parent=1 // pred_fallthru
      _
    // Predicated region
    $region38: #{tpu_custom_call.1} parent=1 // pred_check
      _
    $region39: #{tpu_custom_call.1} parent=1 // pred_check_branch
      %77 = sbr.rel (0) target = $region41
    $region40: #{tpu_custom_call.1} parent=1 // pred_region
      %78 = dma.done [#allocation10], 1024
    $region41: #{tpu_custom_call.1} parent=1 // pred_fallthru
      _
    %v80 = vld [vmem:[#allocation3] sm:$0xf]
    %v81 = vld [vmem:[#allocation3 + $0x4] sm:$0xf]
    %v82 = vld [vmem:[#allocation3 + $0x8] sm:$0xf]
    %v83 = vld [vmem:[#allocation3 + $0xc] sm:$0xf]
    %v84 = vld [vmem:[#allocation3 + $0x10] sm:$0xf]
    %v85 = vld [vmem:[#allocation3 + $0x14] sm:$0xf]
    %v86 = vld [vmem:[#allocation3 + $0x18] sm:$0xf]
    %v87 = vld [vmem:[#allocation3 + $0x1c] sm:$0xf]
    %v88 = vld [vmem:[#allocation3 + $0x20] sm:$0xf]
    %v89 = vld [vmem:[#allocation3 + $0x24] sm:$0xf]
    %v90 = vld [vmem:[#allocation3 + $0x28] sm:$0xf]
    %v91 = vld [vmem:[#allocation3 + $0x2c] sm:$0xf]
    %v92 = vld [vmem:[#allocation3 + $0x30] sm:$0xf]
    %v93 = vld [vmem:[#allocation3 + $0x34] sm:$0xf]
    %v94 = vld [vmem:[#allocation3 + $0x38] sm:$0xf]
    %v95 = vld [vmem:[#allocation3 + $0x3c] sm:$0xf]
    %v96 = vld [vmem:[#allocation6] sm:$0xf]
    %v97 = vld [vmem:[#allocation6 + $0x4] sm:$0xf]
    %v98 = vld [vmem:[#allocation6 + $0x8] sm:$0xf]
    %v99 = vld [vmem:[#allocation6 + $0xc] sm:$0xf]
    %v100 = vld [vmem:[#allocation6 + $0x10] sm:$0xf]
    %v101 = vld [vmem:[#allocation6 + $0x14] sm:$0xf]
    %v102 = vld [vmem:[#allocation6 + $0x18] sm:$0xf]
    %v103 = vld [vmem:[#allocation6 + $0x1c] sm:$0xf]
    %v104 = vld [vmem:[#allocation6 + $0x20] sm:$0xf]
    %v105 = vld [vmem:[#allocation6 + $0x24] sm:$0xf]
    %v106 = vld [vmem:[#allocation6 + $0x28] sm:$0xf]
    %v107 = vld [vmem:[#allocation6 + $0x2c] sm:$0xf]
    %v108 = vld [vmem:[#allocation6 + $0x30] sm:$0xf]
    %v109 = vld [vmem:[#allocation6 + $0x34] sm:$0xf]
    %v110 = vld [vmem:[#allocation6 + $0x38] sm:$0xf]
    %v111 = vld [vmem:[#allocation6 + $0x3c] sm:$0xf]
    %v112 = vld [vmem:[#allocation8] sm:$0xf]
    %v113 = vld [vmem:[#allocation8 + $0x4] sm:$0xf]
    %v114 = vld [vmem:[#allocation8 + $0x8] sm:$0xf]
    %v115 = vld [vmem:[#allocation8 + $0xc] sm:$0xf]
    %v116 = vld [vmem:[#allocation8 + $0x10] sm:$0xf]
    %v117 = vld [vmem:[#allocation8 + $0x14] sm:$0xf]
    %v118 = vld [vmem:[#allocation8 + $0x18] sm:$0xf]
    %v119 = vld [vmem:[#allocation8 + $0x1c] sm:$0xf]
    %v120 = vld [vmem:[#allocation8 + $0x20] sm:$0xf]
    %v121 = vld [vmem:[#allocation8 + $0x24] sm:$0xf]
    %v122 = vld [vmem:[#allocation8 + $0x28] sm:$0xf]
    %v123 = vld [vmem:[#allocation8 + $0x2c] sm:$0xf]
    %v124 = vld [vmem:[#allocation8 + $0x30] sm:$0xf]
    %v125 = vld [vmem:[#allocation8 + $0x34] sm:$0xf]
    %v126 = vld [vmem:[#allocation8 + $0x38] sm:$0xf]
    %v127 = vld [vmem:[#allocation8 + $0x3c] sm:$0xf]
    %v144 = vunpack.c.l.b16 %v96
    %v145 = vunpack.c.l.b16 %v97
    %v146 = vunpack.c.l.b16 %v98
    %v147 = vunpack.c.l.b16 %v99
    %v148 = vunpack.c.l.b16 %v100
    %v149 = vunpack.c.l.b16 %v101
    %v150 = vunpack.c.l.b16 %v102
    %v151 = vunpack.c.l.b16 %v103
    %v152 = vunpack.c.l.b16 %v104
    %v153 = vunpack.c.l.b16 %v105
    %v154 = vunpack.c.l.b16 %v106
    %v155 = vunpack.c.l.b16 %v107
    %v156 = vunpack.c.l.b16 %v108
    %v157 = vunpack.c.l.b16 %v109
    %v158 = vunpack.c.l.b16 %v110
    %v159 = vunpack.c.l.b16 %v111
    %v160 = vpack.c.b16 %v145, %v144
    %v161 = vpack.c.b16 %v147, %v146
    %v162 = vpack.c.b16 %v149, %v148
    %v163 = vpack.c.b16 %v151, %v150
    %v164 = vpack.c.b16 %v153, %v152
    %v165 = vpack.c.b16 %v155, %v154
    %v166 = vpack.c.b16 %v157, %v156
    %v167 = vpack.c.b16 %v159, %v158
    %v192 = vunpack.c.l.b16 %v112
    %v193 = vunpack.c.l.b16 %v113
    %v194 = vunpack.c.l.b16 %v114
    %v195 = vunpack.c.l.b16 %v115
    %v196 = vunpack.c.l.b16 %v116
    %v197 = vunpack.c.l.b16 %v117
    %v198 = vunpack.c.l.b16 %v118
    %v199 = vunpack.c.l.b16 %v119
    %v200 = vunpack.c.l.b16 %v120
    %v201 = vunpack.c.l.b16 %v121
    %v202 = vunpack.c.l.b16 %v122
    %v203 = vunpack.c.l.b16 %v123
    %v204 = vunpack.c.l.b16 %v124
    %v205 = vunpack.c.l.b16 %v125
    %v206 = vunpack.c.l.b16 %v126
    %v207 = vunpack.c.l.b16 %v127
    %v208 = vpack.c.b16 %v193, %v192
    %v209 = vpack.c.b16 %v195, %v194
    %v210 = vpack.c.b16 %v197, %v196
    %v211 = vpack.c.b16 %v199, %v198
    %v212 = vpack.c.b16 %v201, %v200
    %v213 = vpack.c.b16 %v203, %v202
    %v214 = vpack.c.b16 %v205, %v204
    %v215 = vpack.c.b16 %v207, %v206
    %224 = vmatprep.subr.bf16.mxu0 0
    %225 = vmatpush1.bf16.msra.mxu0 %v208
    %226 = vmatprep.subr.bf16.mxu0 0
    %227 = vmatpush1.bf16.msra.mxu0 %v209
    %228 = vmatprep.subr.bf16.mxu0 0
    %229 = vmatpush1.bf16.msra.mxu0 %v210
    %230 = vmatprep.subr.bf16.mxu0 0
    %231 = vmatpush1.bf16.msra.mxu0 %v211
    %232 = vmatprep.subr.bf16.mxu0 0
    %233 = vmatpush1.bf16.msra.mxu0 %v212
    %234 = vmatprep.subr.bf16.mxu0 0
    %235 = vmatpush1.bf16.msra.mxu0 %v213
    %236 = vmatprep.subr.bf16.mxu0 0
    %237 = vmatpush1.bf16.msra.mxu0 %v214
    %238 = vmatprep.subr.bf16.mxu0 0
    %239 = vmatpush1.bf16.msra.mxu0 %v215
    %240 = vmatprep.subr.bf16.mxu0 0
    %241 = vmatpush1.bf16.msra.mxu0 0
    %242 = vmatprep.subr.bf16.mxu0 0
    %243 = vmatpush1.bf16.msra.mxu0 0
    %244 = vmatprep.subr.bf16.mxu0 0
    %245 = vmatpush1.bf16.msra.mxu0 0
    %246 = vmatprep.subr.bf16.mxu0 0
    %247 = vmatpush1.bf16.msra.mxu0 0
    %248 = vmatprep.subr.bf16.mxu0 0
    %249 = vmatpush1.bf16.msra.mxu0 0
    %250 = vmatprep.subr.bf16.mxu0 0
    %251 = vmatpush1.bf16.msra.mxu0 0
    %252 = vmatprep.subr.bf16.mxu0 0
    %253 = vmatpush1.bf16.msra.mxu0 0
    %254 = vmatprep.subr.bf16.mxu0 0
    %255 = vmatpush1.bf16.msra.mxu0 0
    %256 = vmatprep.mubr.bf16.mxu0 0
    %257 = vmatmul.mubr.bf16.gmra.mrb[0].mxu0 %v160
    %v258 = vpop.f32.mrb[0].mxu0
    %v259 = vadd.f32 0.0, %v258
    %v260 = vpop.f32.mrb[0].mxu0
    %v261 = vpop.f32.mrb[0].mxu0
    %v262 = vadd.f32 0.0, %v261
    %v263 = vpop.f32.mrb[0].mxu0
    %264 = vmatprep.mubr.bf16.mxu0 0
    %265 = vmatmul.mubr.bf16.gmra.mrb[0].mxu0 %v161
    %v266 = vpop.f32.mrb[0].mxu0
    %v267 = vadd.f32 0.0, %v266
    %v268 = vpop.f32.mrb[0].mxu0
    %v269 = vpop.f32.mrb[0].mxu0
    %v270 = vadd.f32 0.0, %v269
    %v271 = vpop.f32.mrb[0].mxu0
    %272 = vmatprep.mubr.bf16.mxu0 0
    %273 = vmatmul.mubr.bf16.gmra.mrb[0].mxu0 %v162
    %v274 = vpop.f32.mrb[0].mxu0
    %v275 = vadd.f32 0.0, %v274
    %v276 = vpop.f32.mrb[0].mxu0
    %v277 = vpop.f32.mrb[0].mxu0
    %v278 = vadd.f32 0.0, %v277
    %v279 = vpop.f32.mrb[0].mxu0
    %280 = vmatprep.mubr.bf16.mxu0 0
    %281 = vmatmul.mubr.bf16.gmra.mrb[0].mxu0 %v163
    %v282 = vpop.f32.mrb[0].mxu0
    %v283 = vadd.f32 0.0, %v282
    %v284 = vpop.f32.mrb[0].mxu0
    %v285 = vpop.f32.mrb[0].mxu0
    %v286 = vadd.f32 0.0, %v285
    %v287 = vpop.f32.mrb[0].mxu0
    %288 = vmatprep.mubr.bf16.mxu0 0
    %289 = vmatmul.mubr.bf16.gmra.mrb[0].mxu0 %v164
    %v290 = vpop.f32.mrb[0].mxu0
    %v291 = vadd.f32 0.0, %v290
    %v292 = vpop.f32.mrb[0].mxu0
    %v293 = vpop.f32.mrb[0].mxu0
    %v294 = vadd.f32 0.0, %v293
    %v295 = vpop.f32.mrb[0].mxu0
    %296 = vmatprep.mubr.bf16.mxu0 0
    %297 = vmatmul.mubr.bf16.gmra.mrb[0].mxu0 %v165
    %v298 = vpop.f32.mrb[0].mxu0
    %v299 = vadd.f32 0.0, %v298
    %v300 = vpop.f32.mrb[0].mxu0
    %v301 = vpop.f32.mrb[0].mxu0
    %v302 = vadd.f32 0.0, %v301
    %v303 = vpop.f32.mrb[0].mxu0
    %304 = vmatprep.mubr.bf16.mxu0 0
    %305 = vmatmul.mubr.bf16.gmra.mrb[0].mxu0 %v166
    %v306 = vpop.f32.mrb[0].mxu0
    %v307 = vadd.f32 0.0, %v306
    %v308 = vpop.f32.mrb[0].mxu0
    %v309 = vpop.f32.mrb[0].mxu0
    %v310 = vadd.f32 0.0, %v309
    %v311 = vpop.f32.mrb[0].mxu0
    %312 = vmatprep.mubr.bf16.mxu0 0
    %313 = vmatmul.mubr.bf16.gmra.mrb[0].mxu0 %v167
    %v314 = vpop.f32.mrb[0].mxu0
    %v315 = vadd.f32 0.0, %v314
    %v316 = vpop.f32.mrb[0].mxu0
    %v317 = vpop.f32.mrb[0].mxu0
    %v318 = vadd.f32 0.0, %v317
    %v319 = vpop.f32.mrb[0].mxu0
    %320 = vdwg.mxu0
    %v321 = vpack.c.bf16 %v262, %v259
    %v322 = vpack.c.bf16 %v270, %v267
    %v323 = vpack.c.bf16 %v278, %v275
    %v324 = vpack.c.bf16 %v286, %v283
    %v325 = vpack.c.bf16 %v294, %v291
    %v326 = vpack.c.bf16 %v302, %v299
    %v327 = vpack.c.bf16 %v310, %v307
    %v328 = vpack.c.bf16 %v318, %v315
    %v329 = vld [vmem:[%s3] sm:$0x1]
    %v331 = vlaneseq
    %v332 = vshrl.u32 %v331, 7
    %v333 = vsub.s32 0, %v332
    %v334 = vrot.slane %v329, %v333
    %v352 = vunpack.c.l.b16 %v80
    %v353 = vunpack.c.l.b16 %v81
    %v354 = vunpack.c.l.b16 %v82
    %v355 = vunpack.c.l.b16 %v83
    %v356 = vunpack.c.l.b16 %v84
    %v357 = vunpack.c.l.b16 %v85
    %v358 = vunpack.c.l.b16 %v86
    %v359 = vunpack.c.l.b16 %v87
    %v360 = vunpack.c.l.b16 %v88
    %v361 = vunpack.c.l.b16 %v89
    %v362 = vunpack.c.l.b16 %v90
    %v363 = vunpack.c.l.b16 %v91
    %v364 = vunpack.c.l.b16 %v92
    %v365 = vunpack.c.l.b16 %v93
    %v366 = vunpack.c.l.b16 %v94
    %v367 = vunpack.c.l.b16 %v95
    %v368 = vpack.c.b16 %v353, %v352
    %v369 = vpack.c.b16 %v355, %v354
    %v370 = vpack.c.b16 %v357, %v356
    %v371 = vpack.c.b16 %v359, %v358
    %v372 = vpack.c.b16 %v361, %v360
    %v373 = vpack.c.b16 %v363, %v362
    %v374 = vpack.c.b16 %v365, %v364
    %v375 = vpack.c.b16 %v367, %v366
    %384 = vmatprep.subr.bf16.mxu0 0
    %385 = vmatpush1.bf16.msra.mxu0 %v321
    %386 = vmatprep.subr.bf16.mxu0 0
    %387 = vmatpush1.bf16.msra.mxu0 %v322
    %388 = vmatprep.subr.bf16.mxu0 0
    %389 = vmatpush1.bf16.msra.mxu0 %v323
    %390 = vmatprep.subr.bf16.mxu0 0
    %391 = vmatpush1.bf16.msra.mxu0 %v324
    %392 = vmatprep.subr.bf16.mxu0 0
    %393 = vmatpush1.bf16.msra.mxu0 %v325
    %394 = vmatprep.subr.bf16.mxu0 0
    %395 = vmatpush1.bf16.msra.mxu0 %v326
    %396 = vmatprep.subr.bf16.mxu0 0
    %397 = vmatpush1.bf16.msra.mxu0 %v327
    %398 = vmatprep.subr.bf16.mxu0 0
    %399 = vmatpush1.bf16.msra.mxu0 %v328
    %400 = vmatprep.subr.bf16.mxu0 0
    %401 = vmatpush1.bf16.msra.mxu0 0
    %402 = vmatprep.subr.bf16.mxu0 0
    %403 = vmatpush1.bf16.msra.mxu0 0
    %404 = vmatprep.subr.bf16.mxu0 0
    %405 = vmatpush1.bf16.msra.mxu0 0
    %406 = vmatprep.subr.bf16.mxu0 0
    %407 = vmatpush1.bf16.msra.mxu0 0
    %408 = vmatprep.subr.bf16.mxu0 0
    %409 = vmatpush1.bf16.msra.mxu0 0
    %410 = vmatprep.subr.bf16.mxu0 0
    %411 = vmatpush1.bf16.msra.mxu0 0
    %412 = vmatprep.subr.bf16.mxu0 0
    %413 = vmatpush1.bf16.msra.mxu0 0
    %414 = vmatprep.subr.bf16.mxu0 0
    %415 = vmatpush1.bf16.msra.mxu0 0
    %416 = vmatprep.mubr.bf16.mxu0 0
    %417 = vmatmul.mubr.bf16.gmra.mrb[0].mxu0 %v368
    %v418 = vpop.f32.mrb[0].mxu0
    %v419 = vadd.f32 %v334, %v418
    %v420 = vpop.f32.mrb[0].mxu0
    %v421 = vpop.f32.mrb[0].mxu0
    %v422 = vadd.f32 %v334, %v421
    %v423 = vpop.f32.mrb[0].mxu0
    %424 = vmatprep.mubr.bf16.mxu0 0
    %425 = vmatmul.mubr.bf16.gmra.mrb[0].mxu0 %v369
    %v426 = vpop.f32.mrb[0].mxu0
    %v427 = vadd.f32 %v334, %v426
    %v428 = vpop.f32.mrb[0].mxu0
    %v429 = vpop.f32.mrb[0].mxu0
    %v430 = vadd.f32 %v334, %v429
    %v431 = vpop.f32.mrb[0].mxu0
    %432 = vmatprep.mubr.bf16.mxu0 0
    %433 = vmatmul.mubr.bf16.gmra.mrb[0].mxu0 %v370
    %v434 = vpop.f32.mrb[0].mxu0
    %v435 = vadd.f32 %v334, %v434
    %v436 = vpop.f32.mrb[0].mxu0
    %v437 = vpop.f32.mrb[0].mxu0
    %v438 = vadd.f32 %v334, %v437
    %v439 = vpop.f32.mrb[0].mxu0
    %440 = vmatprep.mubr.bf16.mxu0 0
    %441 = vmatmul.mubr.bf16.gmra.mrb[0].mxu0 %v371
    %v442 = vpop.f32.mrb[0].mxu0
    %v443 = vadd.f32 %v334, %v442
    %v444 = vpop.f32.mrb[0].mxu0
    %v445 = vpop.f32.mrb[0].mxu0
    %v446 = vadd.f32 %v334, %v445
    %v447 = vpop.f32.mrb[0].mxu0
    %448 = vmatprep.mubr.bf16.mxu0 0
    %449 = vmatmul.mubr.bf16.gmra.mrb[0].mxu0 %v372
    %v450 = vpop.f32.mrb[0].mxu0
    %v451 = vadd.f32 %v334, %v450
    %v452 = vpop.f32.mrb[0].mxu0
    %v453 = vpop.f32.mrb[0].mxu0
    %v454 = vadd.f32 %v334, %v453
    %v455 = vpop.f32.mrb[0].mxu0
    %456 = vmatprep.mubr.bf16.mxu0 0
    %457 = vmatmul.mubr.bf16.gmra.mrb[0].mxu0 %v373
    %v458 = vpop.f32.mrb[0].mxu0
    %v459 = vadd.f32 %v334, %v458
    %v460 = vpop.f32.mrb[0].mxu0
    %v461 = vpop.f32.mrb[0].mxu0
    %v462 = vadd.f32 %v334, %v461
    %v463 = vpop.f32.mrb[0].mxu0
    %464 = vmatprep.mubr.bf16.mxu0 0
    %465 = vmatmul.mubr.bf16.gmra.mrb[0].mxu0 %v374
    %v466 = vpop.f32.mrb[0].mxu0
    %v467 = vadd.f32 %v334, %v466
    %v468 = vpop.f32.mrb[0].mxu0
    %v469 = vpop.f32.mrb[0].mxu0
    %v470 = vadd.f32 %v334, %v469
    %v471 = vpop.f32.mrb[0].mxu0
    %472 = vmatprep.mubr.bf16.mxu0 0
    %473 = vmatmul.mubr.bf16.gmra.mrb[0].mxu0 %v375
    %v474 = vpop.f32.mrb[0].mxu0
    %v475 = vadd.f32 %v334, %v474
    %v476 = vpop.f32.mrb[0].mxu0
    %v477 = vpop.f32.mrb[0].mxu0
    %v478 = vadd.f32 %v334, %v477
    %v479 = vpop.f32.mrb[0].mxu0
    %480 = vdwg.mxu0
    %v481 = vmax.f32 %v419, 0.0
    %v482 = vmax.f32 %v422, 0.0
    %v483 = vmax.f32 %v427, 0.0
    %v484 = vmax.f32 %v430, 0.0
    %v485 = vmax.f32 %v435, 0.0
    %v486 = vmax.f32 %v438, 0.0
    %v487 = vmax.f32 %v443, 0.0
    %v488 = vmax.f32 %v446, 0.0
    %v489 = vmax.f32 %v451, 0.0
    %v490 = vmax.f32 %v454, 0.0
    %v491 = vmax.f32 %v459, 0.0
    %v492 = vmax.f32 %v462, 0.0
    %v493 = vmax.f32 %v467, 0.0
    %v494 = vmax.f32 %v470, 0.0
    %v495 = vmax.f32 %v475, 0.0
    %v496 = vmax.f32 %v478, 0.0
    %v497 = vpack.c.bf16 %v482, %v481
    %v498 = vpack.c.bf16 %v484, %v483
    %v499 = vpack.c.bf16 %v486, %v485
    %v500 = vpack.c.bf16 %v488, %v487
    %v501 = vpack.c.bf16 %v490, %v489
    %v502 = vpack.c.bf16 %v492, %v491
    %v503 = vpack.c.bf16 %v494, %v493
    %v504 = vpack.c.bf16 %v496, %v495
    %505 = vst [vmem:[#allocation2] sm:$0xff] %v497
    %506 = vst [vmem:[#allocation2 + $0x8] sm:$0xff] %v498
    %507 = vst [vmem:[#allocation2 + $0x10] sm:$0xff] %v499
    %508 = vst [vmem:[#allocation2 + $0x18] sm:$0xff] %v500
    %509 = vst [vmem:[#allocation2 + $0x20] sm:$0xff] %v501
    %510 = vst [vmem:[#allocation2 + $0x28] sm:$0xff] %v502
    %511 = vst [vmem:[#allocation2 + $0x30] sm:$0xff] %v503
    %512 = vst [vmem:[#allocation2 + $0x38] sm:$0xff] %v504
    %v513 = vld [vmem:[#allocation2] sm:$0xff]
    %v514 = vld [vmem:[#allocation2 + $0x8] sm:$0xff]
    %v515 = vld [vmem:[#allocation2 + $0x10] sm:$0xff]
    %v516 = vld [vmem:[#allocation2 + $0x18] sm:$0xff]
    %v517 = vld [vmem:[#allocation2 + $0x20] sm:$0xff]
    %v518 = vld [vmem:[#allocation2 + $0x28] sm:$0xff]
    %v519 = vld [vmem:[#allocation2 + $0x30] sm:$0xff]
    %v520 = vld [vmem:[#allocation2 + $0x38] sm:$0xff]
    %v521 = vld [vmem:[#allocation9] sm:$0xf]
    %v522 = vld [vmem:[#allocation9 + $0x4] sm:$0xf]
    %v523 = vld [vmem:[#allocation9 + $0x8] sm:$0xf]
    %v524 = vld [vmem:[#allocation9 + $0xc] sm:$0xf]
    %v525 = vld [vmem:[#allocation9 + $0x10] sm:$0xf]
    %v526 = vld [vmem:[#allocation9 + $0x14] sm:$0xf]
    %v527 = vld [vmem:[#allocation9 + $0x18] sm:$0xf]
    %v528 = vld [vmem:[#allocation9 + $0x1c] sm:$0xf]
    %v529 = vld [vmem:[#allocation9 + $0x20] sm:$0xf]
    %v530 = vld [vmem:[#allocation9 + $0x24] sm:$0xf]
    %v531 = vld [vmem:[#allocation9 + $0x28] sm:$0xf]
    %v532 = vld [vmem:[#allocation9 + $0x2c] sm:$0xf]
    %v533 = vld [vmem:[#allocation9 + $0x30] sm:$0xf]
    %v534 = vld [vmem:[#allocation9 + $0x34] sm:$0xf]
    %v535 = vld [vmem:[#allocation9 + $0x38] sm:$0xf]
    %v536 = vld [vmem:[#allocation9 + $0x3c] sm:$0xf]
    %v553 = vunpack.c.l.b16 %v521
    %v554 = vunpack.c.l.b16 %v522
    %v555 = vunpack.c.l.b16 %v523
    %v556 = vunpack.c.l.b16 %v524
    %v557 = vunpack.c.l.b16 %v525
    %v558 = vunpack.c.l.b16 %v526
    %v559 = vunpack.c.l.b16 %v527
    %v560 = vunpack.c.l.b16 %v528
    %v561 = vunpack.c.l.b16 %v529
    %v562 = vunpack.c.l.b16 %v530
    %v563 = vunpack.c.l.b16 %v531
    %v564 = vunpack.c.l.b16 %v532
    %v565 = vunpack.c.l.b16 %v533
    %v566 = vunpack.c.l.b16 %v534
    %v567 = vunpack.c.l.b16 %v535
    %v568 = vunpack.c.l.b16 %v536
    %v569 = vpack.c.b16 %v554, %v553
    %v570 = vpack.c.b16 %v556, %v555
    %v571 = vpack.c.b16 %v558, %v557
    %v572 = vpack.c.b16 %v560, %v559
    %v573 = vpack.c.b16 %v562, %v561
    %v574 = vpack.c.b16 %v564, %v563
    %v575 = vpack.c.b16 %v566, %v565
    %v576 = vpack.c.b16 %v568, %v567
    %585 = vmatprep.subr.bf16.mxu0 0
    %586 = vmatpush1.bf16.msra.mxu0 %v569
    %587 = vmatprep.subr.bf16.mxu0 0
    %588 = vmatpush1.bf16.msra.mxu0 %v570
    %589 = vmatprep.subr.bf16.mxu0 0
    %590 = vmatpush1.bf16.msra.mxu0 %v571
    %591 = vmatprep.subr.bf16.mxu0 0
    %592 = vmatpush1.bf16.msra.mxu0 %v572
    %593 = vmatprep.subr.bf16.mxu0 0
    %594 = vmatpush1.bf16.msra.mxu0 %v573
    %595 = vmatprep.subr.bf16.mxu0 0
    %596 = vmatpush1.bf16.msra.mxu0 %v574
    %597 = vmatprep.subr.bf16.mxu0 0
    %598 = vmatpush1.bf16.msra.mxu0 %v575
    %599 = vmatprep.subr.bf16.mxu0 0
    %600 = vmatpush1.bf16.msra.mxu0 %v576
    %601 = vmatprep.subr.bf16.mxu0 0
    %602 = vmatpush1.bf16.msra.mxu0 0
    %603 = vmatprep.subr.bf16.mxu0 0
    %604 = vmatpush1.bf16.msra.mxu0 0
    %605 = vmatprep.subr.bf16.mxu0 0
    %606 = vmatpush1.bf16.msra.mxu0 0
    %607 = vmatprep.subr.bf16.mxu0 0
    %608 = vmatpush1.bf16.msra.mxu0 0
    %609 = vmatprep.subr.bf16.mxu0 0
    %610 = vmatpush1.bf16.msra.mxu0 0
    %611 = vmatprep.subr.bf16.mxu0 0
    %612 = vmatpush1.bf16.msra.mxu0 0
    %613 = vmatprep.subr.bf16.mxu0 0
    %614 = vmatpush1.bf16.msra.mxu0 0
    %615 = vmatprep.subr.bf16.mxu0 0
    %616 = vmatpush1.bf16.msra.mxu0 0
    %617 = vmatprep.mubr.bf16.mxu0 0
    %618 = vmatmul.mubr.bf16.gmra.mrb[0].mxu0 %v513
    %v619 = vpop.f32.mrb[0].mxu0
    %v620 = vadd.f32 0.0, %v619
    %v621 = vpop.f32.mrb[0].mxu0
    %v622 = vpop.f32.mrb[0].mxu0
    %v623 = vadd.f32 0.0, %v622
    %v624 = vpop.f32.mrb[0].mxu0
    %625 = vmatprep.mubr.bf16.mxu0 0
    %626 = vmatmul.mubr.bf16.gmra.mrb[0].mxu0 %v514
    %v627 = vpop.f32.mrb[0].mxu0
    %v628 = vadd.f32 0.0, %v627
    %v629 = vpop.f32.mrb[0].mxu0
    %v630 = vpop.f32.mrb[0].mxu0
    %v631 = vadd.f32 0.0, %v630
    %v632 = vpop.f32.mrb[0].mxu0
    %633 = vmatprep.mubr.bf16.mxu0 0
    %634 = vmatmul.mubr.bf16.gmra.mrb[0].mxu0 %v515
    %v635 = vpop.f32.mrb[0].mxu0
    %v636 = vadd.f32 0.0, %v635
    %v637 = vpop.f32.mrb[0].mxu0
    %v638 = vpop.f32.mrb[0].mxu0
    %v639 = vadd.f32 0.0, %v638
    %v640 = vpop.f32.mrb[0].mxu0
    %641 = vmatprep.mubr.bf16.mxu0 0
    %642 = vmatmul.mubr.bf16.gmra.mrb[0].mxu0 %v516
    %v643 = vpop.f32.mrb[0].mxu0
    %v644 = vadd.f32 0.0, %v643
    %v645 = vpop.f32.mrb[0].mxu0
    %v646 = vpop.f32.mrb[0].mxu0
    %v647 = vadd.f32 0.0, %v646
    %v648 = vpop.f32.mrb[0].mxu0
    %649 = vmatprep.mubr.bf16.mxu0 0
    %650 = vmatmul.mubr.bf16.gmra.mrb[0].mxu0 %v517
    %v651 = vpop.f32.mrb[0].mxu0
    %v652 = vadd.f32 0.0, %v651
    %v653 = vpop.f32.mrb[0].mxu0
    %v654 = vpop.f32.mrb[0].mxu0
    %v655 = vadd.f32 0.0, %v654
    %v656 = vpop.f32.mrb[0].mxu0
    %657 = vmatprep.mubr.bf16.mxu0 0
    %658 = vmatmul.mubr.bf16.gmra.mrb[0].mxu0 %v518
    %v659 = vpop.f32.mrb[0].mxu0
    %v660 = vadd.f32 0.0, %v659
    %v661 = vpop.f32.mrb[0].mxu0
    %v662 = vpop.f32.mrb[0].mxu0
    %v663 = vadd.f32 0.0, %v662
    %v664 = vpop.f32.mrb[0].mxu0
    %665 = vmatprep.mubr.bf16.mxu0 0
    %666 = vmatmul.mubr.bf16.gmra.mrb[0].mxu0 %v519
    %v667 = vpop.f32.mrb[0].mxu0
    %v668 = vadd.f32 0.0, %v667
    %v669 = vpop.f32.mrb[0].mxu0
    %v670 = vpop.f32.mrb[0].mxu0
    %v671 = vadd.f32 0.0, %v670
    %v672 = vpop.f32.mrb[0].mxu0
    %673 = vmatprep.mubr.bf16.mxu0 0
    %674 = vmatmul.mubr.bf16.gmra.mrb[0].mxu0 %v520
    %v675 = vpop.f32.mrb[0].mxu0
    %v676 = vadd.f32 0.0, %v675
    %v677 = vpop.f32.mrb[0].mxu0
    %v678 = vpop.f32.mrb[0].mxu0
    %v679 = vadd.f32 0.0, %v678
    %v680 = vpop.f32.mrb[0].mxu0
    %681 = vdwg.mxu0
    %v682 = vpack.c.bf16 %v623, %v620
    %v683 = vpack.c.bf16 %v631, %v628
    %v684 = vpack.c.bf16 %v639, %v636
    %v685 = vpack.c.bf16 %v647, %v644
    %v686 = vpack.c.bf16 %v655, %v652
    %v687 = vpack.c.bf16 %v663, %v660
    %v688 = vpack.c.bf16 %v671, %v668
    %v689 = vpack.c.bf16 %v679, %v676
    %v690 = vld [vmem:[%s5] sm:$0x1]
    %v692 = vlaneseq
    %v693 = vshrl.u32 %v692, 7
    %v694 = vsub.s32 0, %v693
    %v695 = vrot.slane %v690, %v694
    %697 = vmatprep.subr.bf16.mxu0 0
    %698 = vmatpush1.bf16.msra.mxu0 %v682
    %699 = vmatprep.subr.bf16.mxu0 0
    %700 = vmatpush1.bf16.msra.mxu0 %v683
    %701 = vmatprep.subr.bf16.mxu0 0
    %702 = vmatpush1.bf16.msra.mxu0 %v684
    %703 = vmatprep.subr.bf16.mxu0 0
    %704 = vmatpush1.bf16.msra.mxu0 %v685
    %705 = vmatprep.subr.bf16.mxu0 0
    %706 = vmatpush1.bf16.msra.mxu0 %v686
    %707 = vmatprep.subr.bf16.mxu0 0
    %708 = vmatpush1.bf16.msra.mxu0 %v687
    %709 = vmatprep.subr.bf16.mxu0 0
    %710 = vmatpush1.bf16.msra.mxu0 %v688
    %711 = vmatprep.subr.bf16.mxu0 0
    %712 = vmatpush1.bf16.msra.mxu0 %v689
    %713 = vmatprep.subr.bf16.mxu0 0
    %714 = vmatpush1.bf16.msra.mxu0 0
    %715 = vmatprep.subr.bf16.mxu0 0
    %716 = vmatpush1.bf16.msra.mxu0 0
    %717 = vmatprep.subr.bf16.mxu0 0
    %718 = vmatpush1.bf16.msra.mxu0 0
    %719 = vmatprep.subr.bf16.mxu0 0
    %720 = vmatpush1.bf16.msra.mxu0 0
    %721 = vmatprep.subr.bf16.mxu0 0
    %722 = vmatpush1.bf16.msra.mxu0 0
    %723 = vmatprep.subr.bf16.mxu0 0
    %724 = vmatpush1.bf16.msra.mxu0 0
    %725 = vmatprep.subr.bf16.mxu0 0
    %726 = vmatpush1.bf16.msra.mxu0 0
    %727 = vmatprep.subr.bf16.mxu0 0
    %728 = vmatpush1.bf16.msra.mxu0 0
    %729 = vmatprep.mubr.bf16.mxu0 0
    %730 = vmatmul.mubr.bf16.gmra.mrb[0].mxu0 %v368
    %v731 = vpop.f32.mrb[0].mxu0
    %v732 = vadd.f32 %v695, %v731
    %v733 = vpop.f32.mrb[0].mxu0
    %v734 = vpop.f32.mrb[0].mxu0
    %v735 = vadd.f32 %v695, %v734
    %v736 = vpop.f32.mrb[0].mxu0
    %737 = vmatprep.mubr.bf16.mxu0 0
    %738 = vmatmul.mubr.bf16.gmra.mrb[0].mxu0 %v369
    %v739 = vpop.f32.mrb[0].mxu0
    %v740 = vadd.f32 %v695, %v739
    %v741 = vpop.f32.mrb[0].mxu0
    %v742 = vpop.f32.mrb[0].mxu0
    %v743 = vadd.f32 %v695, %v742
    %v744 = vpop.f32.mrb[0].mxu0
    %745 = vmatprep.mubr.bf16.mxu0 0
    %746 = vmatmul.mubr.bf16.gmra.mrb[0].mxu0 %v370
    %v747 = vpop.f32.mrb[0].mxu0
    %v748 = vadd.f32 %v695, %v747
    %v749 = vpop.f32.mrb[0].mxu0
    %v750 = vpop.f32.mrb[0].mxu0
    %v751 = vadd.f32 %v695, %v750
    %v752 = vpop.f32.mrb[0].mxu0
    %753 = vmatprep.mubr.bf16.mxu0 0
    %754 = vmatmul.mubr.bf16.gmra.mrb[0].mxu0 %v371
    %v755 = vpop.f32.mrb[0].mxu0
    %v756 = vadd.f32 %v695, %v755
    %v757 = vpop.f32.mrb[0].mxu0
    %v758 = vpop.f32.mrb[0].mxu0
    %v759 = vadd.f32 %v695, %v758
    %v760 = vpop.f32.mrb[0].mxu0
    %761 = vmatprep.mubr.bf16.mxu0 0
    %762 = vmatmul.mubr.bf16.gmra.mrb[0].mxu0 %v372
    %v763 = vpop.f32.mrb[0].mxu0
    %v764 = vadd.f32 %v695, %v763
    %v765 = vpop.f32.mrb[0].mxu0
    %v766 = vpop.f32.mrb[0].mxu0
    %v767 = vadd.f32 %v695, %v766
    %v768 = vpop.f32.mrb[0].mxu0
    %769 = vmatprep.mubr.bf16.mxu0 0
    %770 = vmatmul.mubr.bf16.gmra.mrb[0].mxu0 %v373
    %v771 = vpop.f32.mrb[0].mxu0
    %v772 = vadd.f32 %v695, %v771
    %v773 = vpop.f32.mrb[0].mxu0
    %v774 = vpop.f32.mrb[0].mxu0
    %v775 = vadd.f32 %v695, %v774
    %v776 = vpop.f32.mrb[0].mxu0
    %777 = vmatprep.mubr.bf16.mxu0 0
    %778 = vmatmul.mubr.bf16.gmra.mrb[0].mxu0 %v374
    %v779 = vpop.f32.mrb[0].mxu0
    %v780 = vadd.f32 %v695, %v779
    %v781 = vpop.f32.mrb[0].mxu0
    %v782 = vpop.f32.mrb[0].mxu0
    %v783 = vadd.f32 %v695, %v782
    %v784 = vpop.f32.mrb[0].mxu0
    %785 = vmatprep.mubr.bf16.mxu0 0
    %786 = vmatmul.mubr.bf16.gmra.mrb[0].mxu0 %v375
    %v787 = vpop.f32.mrb[0].mxu0
    %v788 = vadd.f32 %v695, %v787
    %v789 = vpop.f32.mrb[0].mxu0
    %v790 = vpop.f32.mrb[0].mxu0
    %v791 = vadd.f32 %v695, %v790
    %v792 = vpop.f32.mrb[0].mxu0
    %793 = vdwg.mxu0
    %794 = vst [vmem:[#allocation11] sm:$0xff] %v732
    %795 = vst [vmem:[#allocation11 + $0x8] sm:$0xff] %v735
    %796 = vst [vmem:[#allocation11 + $0x10] sm:$0xff] %v740
    %797 = vst [vmem:[#allocation11 + $0x18] sm:$0xff] %v743
    %798 = vst [vmem:[#allocation11 + $0x20] sm:$0xff] %v748
    %799 = vst [vmem:[#allocation11 + $0x28] sm:$0xff] %v751
    %800 = vst [vmem:[#allocation11 + $0x30] sm:$0xff] %v756
    %801 = vst [vmem:[#allocation11 + $0x38] sm:$0xff] %v759
    %802 = vst [vmem:[#allocation11 + $0x40] sm:$0xff] %v764
    %803 = vst [vmem:[#allocation11 + $0x48] sm:$0xff] %v767
    %804 = vst [vmem:[#allocation11 + $0x50] sm:$0xff] %v772
    %805 = vst [vmem:[#allocation11 + $0x58] sm:$0xff] %v775
    %806 = vst [vmem:[#allocation11 + $0x60] sm:$0xff] %v780
    %807 = vst [vmem:[#allocation11 + $0x68] sm:$0xff] %v783
    %808 = vst [vmem:[#allocation11 + $0x70] sm:$0xff] %v788
    %809 = vst [vmem:[#allocation11 + $0x78] sm:$0xff] %v791
    // Predicated region
    $region42: #{tpu_custom_call.1} parent=1 // pred_check
      _
    $region43: #{tpu_custom_call.1} parent=1 // pred_check_branch
      %811 = sbr.rel (0) target = $region45
    $region44: #{tpu_custom_call.1} parent=1 // pred_region
      %s813 = ssub.s32 2048, 2048
      %814 = vsyncadd [#allocation5], %s813
      %s815 = sshll.u32 [#allocation11], 4
      %s816 = int_to_ptr.vmem [resolvable:$true] %s815
      %821 = dma.vmem_to_hbm [thread:$0]  %s816, 2048, %s6, [#allocation5], 128, 128, 8
    $region45: #{tpu_custom_call.1} parent=1 // pred_fallthru
      _
    // Predicated region
    $region46: #{tpu_custom_call.1} parent=1 // pred_check
      _
    $region47: #{tpu_custom_call.1} parent=1 // pred_check_branch
      %823 = sbr.rel (0) target = $region49
    $region48: #{tpu_custom_call.1} parent=1 // pred_region
      %824 = dma.done [#allocation5], 2048
    $region49: #{tpu_custom_call.1} parent=1 // pred_fallthru
      _
    %825 = vsyncpa [#allocation4], 1
    %826 = vsyncpa [#allocation7], 1
    %827 = vsyncpa [#allocation10], 1
    %828 = vsyncpa [#allocation5], 1

</llo_original>
